<compile_context>
chip_gen: v5e
topology: v5e:2x2
jax: 0.10.0
libtpu: 0.0.40
codegen_flags: <defaults>
</compile_context>

<pallas_src>
import jax
import jax.numpy as jnp
from jax import lax
from jax.experimental import pallas as pl
from jax.experimental.pallas import tpu as pltpu

D_IN = 11            # fc1 in_features / fc2 out_features
D_HID = 3            # fc1 out_features / fc2 in_features
FOLD = 11            # lane-fold factor: folded last dim = 121 (~95% of 128 lanes used)
D_FOLD = D_IN * FOLD # 121
ROW_PAD = FOLD * 8   # pad B to a multiple of 88 -> folded rows are a multiple of 8 (sublane)
TILE_CAP = 4096      # folded-row tile cap: 4 * 4096 * 512 B = 8 MiB of double-buffered VMEM


def _round_up(x, m):
    return ((x + m - 1) // m) * m


def _net1_kernel(x_ref, w_ref, o_ref):
    # x: (TB, 121)   w: (121, 121) block-diagonal fused weight   o: (TB, 121)
    o_ref[...] = jnp.dot(
        x_ref[...], w_ref[...], preferred_element_type=jnp.float32
    ).astype(o_ref.dtype)


def net1_forward(x, w1, w2, *, tile=None, min_kernel_rows=4096, force_kernel=False):
    """Forward pass of net1.

    x : (B, 11)  float
    w1: (3, 11)  float  -- PyTorch fc1.weight layout (out, in)
    w2: (11, 3)  float  -- PyTorch fc2.weight layout (out, in)
    tile: optional folded-row tile size override (folded row == 11 original rows).
    """
    B, d_in = x.shape
    assert d_in == D_IN and w1.shape == (D_HID, D_IN) and w2.shape == (D_IN, D_HID)

    x = x.astype(jnp.float32)
    w1 = w1.astype(jnp.float32)
    w2 = w2.astype(jnp.float32)

    # Fuse the two linear layers once, outside the kernel, at full f32 precision.
    w_fused = jnp.dot(w1.T, w2.T, precision=lax.Precision.HIGHEST)  # (11, 11)

    # Small-B fast path: a single fused XLA matmul beats any kernel launch here.
    if not force_kernel and B < min_kernel_rows:
        return jnp.dot(x, w_fused, precision=lax.Precision.HIGHEST)

    # ---- lane-folded Pallas path ----------------------------------------------------
    # Block-diagonal weight: k copies of w_fused on the diagonal (built once, tiny).
    w_bd = jnp.kron(jnp.eye(FOLD, dtype=jnp.float32), w_fused)  # (121, 121)

    # Pad B to a multiple of 88 so the folded view is exact and sublane-aligned; the pad
    # rows compute zeros and are sliced off afterwards (keeps all DMA blocks full-width).
    B_pad = _round_up(B, ROW_PAD)
    if B_pad != B:
        x = jnp.pad(x, ((0, B_pad - B), (0, 0)))
    n_fold = B_pad // FOLD                 # multiple of 8
    xf = x.reshape(n_fold, D_FOLD)         # contiguous, free reshape

    # Folded-row tile: multiple of 8, capped for VMEM (v5e 16 MiB default scoped VMEM),
    # and >= 2 grid steps for medium/large B so v7x's two TensorCores both get work.
    if tile is None:
        if n_fold <= 16:
            tb = n_fold                                        # single full-extent block
        else:
            tb = min(TILE_CAP, _round_up(pl.cdiv(n_fold, 2), 8))
    else:
        tb = n_fold if tile >= n_fold else _round_up(tile, 8)

    grid = (pl.cdiv(n_fold, tb),)

    out_f = pl.pallas_call(
        _net1_kernel,
        out_shape=jax.ShapeDtypeStruct((n_fold, D_FOLD), jnp.float32),
        grid_spec=pltpu.PrefetchScalarGridSpec(
            num_scalar_prefetch=0,
            grid=grid,
            in_specs=[
                pl.BlockSpec((tb, D_FOLD), lambda i: (i, 0)),        # folded x rows
                pl.BlockSpec((D_FOLD, D_FOLD), lambda i: (0, 0)),    # resident fused weight
            ],
            out_specs=pl.BlockSpec((tb, D_FOLD), lambda i: (i, 0)),
        ),
        compiler_params=pltpu.CompilerParams(
            dimension_semantics=("parallel",),  # shard batch tiles across TCs on v7x
        ),
    )(xf, w_bd)

    out = out_f.reshape(B_pad, D_IN)
    if B_pad != B:
        out = out[:B]
    return out


if __name__ == "__main__":
    key = jax.random.PRNGKey(0)
    kx, kw1, kw2 = jax.random.split(key, 3)

    B = 8
    x = jax.random.normal(kx, (B, D_IN), dtype=jnp.float32)

    # Use a NONZERO fc1 weight for validation so a wrong transpose / swapped-weight bug
    # cannot hide behind an all-zero output.
    w1 = jax.random.normal(kw1, (D_HID, D_IN), dtype=jnp.float32) * 0.1
    # fc2.weight: PyTorch default init U(-1/sqrt(in), 1/sqrt(in)), in=3, shape (11, 3)
    bound = 1.0 / jnp.sqrt(3.0)
    w2 = jax.random.uniform(
        kw2, (D_IN, D_HID), dtype=jnp.float32, minval=-bound, maxval=bound
    )

    w_fused_ref = jnp.dot(w1.T, w2.T, precision=lax.Precision.HIGHEST)
    ref = jnp.dot(
        jnp.dot(x, w1.T, precision=lax.Precision.HIGHEST),
        w2.T,
        precision=lax.Precision.HIGHEST,
    )

    # --- small B, Pallas kernel path (single grid step, lane-folded) ---
    out = net1_forward(x, w1, w2, force_kernel=True)
    jax.block_until_ready(out)
    assert out.shape == (B, D_IN)
    assert jnp.allclose(out, ref, atol=1e-4), "mismatch vs reference (B=8, kernel path)"

    # --- module-faithful init: fc1.weight == 0 -> output identically zero ---
    out_zero = net1_forward(x, jnp.zeros((D_HID, D_IN), jnp.float32), w2, force_kernel=True)
    jax.block_until_ready(out_zero)
    assert jnp.allclose(out_zero, jnp.zeros_like(out_zero)), "zero-init case mismatch"

    # --- multi-step tiled grid + batch padding (B not a multiple of 88) ---
    B2 = 300   # pads to 352 rows -> 32 folded rows; tile=16 -> grid=(2,)
    x2 = jax.random.normal(kx, (B2, D_IN), dtype=jnp.float32)
    out2 = net1_forward(x2, w1, w2, force_kernel=True, tile=16)
    jax.block_until_ready(out2)
    ref2 = jnp.dot(x2, w_fused_ref, precision=lax.Precision.HIGHEST)
    assert out2.shape == (B2, D_IN)
    assert jnp.allclose(out2, ref2, atol=1e-4), "mismatch vs reference (tiled grid)"

    # --- small-B fast path (plain XLA, no pallas_call) ---
    out3 = net1_forward(x, w1, w2)
    jax.block_until_ready(out3)
    assert jnp.allclose(out3, ref, atol=1e-4), "mismatch vs reference (XLA fast path)"

    print("KERNEL_OK")
</pallas_src>

<mosaic_0001>
module attributes {stable_mosaic.version = 11 : i64} {
  func.func @_net1_kernel(%arg0: i32, %arg1: memref<8x121xf32, #tpu.memory_space<vmem>>, %arg2: memref<121x121xf32, #tpu.memory_space<vmem>>, %arg3: memref<8x121xf32, #tpu.memory_space<vmem>>) attributes {dimension_semantics = [#tpu.dimension_semantics<parallel>], iteration_bounds = array<i64: 1>, scalar_prefetch = 0 : i64, scratch_operands = 0 : i64, tpu.core_type = #tpu.core_type<tc>, window_params = [{transform_indices = @transform_0, window_bounds = array<i64: 8, 121>}, {pipeline_mode = #tpu.pipeline_mode<synchronous>, transform_indices = @transform_1, window_bounds = array<i64: 121, 121>}, {transform_indices = @transform_2, window_bounds = array<i64: 8, 121>}]} {
    %c0 = arith.constant 0 : index
    %c0_0 = arith.constant 0 : index
    %0 = vector.load %arg1[%c0, %c0_0] : memref<8x121xf32, #tpu.memory_space<vmem>>, vector<8x121xf32>
    %c0_1 = arith.constant 0 : index
    %c0_2 = arith.constant 0 : index
    %1 = vector.load %arg2[%c0_1, %c0_2] : memref<121x121xf32, #tpu.memory_space<vmem>>, vector<121x121xf32>
    %cst = arith.constant dense<0.000000e+00> : vector<8x121xf32>
    %2 = tpu.matmul %0, %1, %cst {dimension_numbers = #tpu.dot_dimension_numbers<[1], [0], [0], [1], [0, 0, 1, 1], [], []>} : vector<8x121xf32>, vector<121x121xf32>, vector<8x121xf32> -> vector<8x121xf32>
    %c0_3 = arith.constant 0 : index
    %c0_4 = arith.constant 0 : index
    %3 = vector.load %arg3[%c0_3, %c0_4] : memref<8x121xf32, #tpu.memory_space<vmem>>, vector<8x121xf32>
    tpu.vector_store %arg3[%c0_3, %c0_4], %2 {strides = array<i32>} : memref<8x121xf32, #tpu.memory_space<vmem>>, vector<8x121xf32>,
    return
  }
  func.func @transform_0(%arg0: i32) -> (i32, i32) {
    %c0_i32 = arith.constant 0 : i32
    %c0_i32_0 = arith.constant 0 : i32
    return %arg0, %c0_i32 : i32, i32
  }
  func.func @transform_1(%arg0: i32) -> (i32, i32) {
    %c0_i32 = arith.constant 0 : i32
    %c0_i32_0 = arith.constant 0 : i32
    %c0_i32_1 = arith.constant 0 : i32
    return %c0_i32, %c0_i32_0 : i32, i32
  }
  func.func @transform_2(%arg0: i32) -> (i32, i32) {
    %c0_i32 = arith.constant 0 : i32
    %c0_i32_0 = arith.constant 0 : i32
    return %arg0, %c0_i32 : i32, i32
  }
}

</mosaic_0001>

<llo_original>
// kernel: tpu_custom_call.1
$region0: #{tpu_custom_call.1}
  #allocation0 [shape = 'u32[]', space=smem, size = 0x4, offset = 0x4, fixed_abs, tag = 'smem constant byte address 0x4 - core index']
  #allocation1 [shape = 'u32[72,128]{1,0:T(1,128)}', space=vmem, size = 0x9000, scoped, tag = 'internal scratch']
  %s0 = inlined_call_operand.hbm [shape: f32[8,121], index: 0, kind: input, shape index: {}]
  %s1 = inlined_call_operand.hbm [shape: f32[121,121], index: 1, kind: input, shape index: {}]
  %s2 = inlined_call_operand.hbm [shape: f32[8,121], index: 2, kind: output, shape index: {}]
  %s3 = sld [smem:[#allocation0]]
  $region26: #{tpu_custom_call.1} parent=0
    _
  %s5 = ssub.s32 1, %s3
  %s6 = scalar_select 0, %s5, %s3
  $region1: #{tpu_custom_call.1} parent=0
    #allocation2 [shape = 'u8[4096]{0}', space=vmem, size = 0x1000, scoped, tag = 'input window, operand 0, single buffered']
    #allocation3 [shape = 's32[1]{0}', space=sflag, size = 0x4, scoped, tag = 'scoped memory for tpu_custom_call.1']
    #allocation4 [shape = 's32[1]{0}', space=sflag, size = 0x4, scoped, tag = 'scoped memory for tpu_custom_call.1']
    #allocation5 [shape = 'u8[65536]{0}', space=vmem, size = 0x10000, scoped, tag = 'input window, operand 1, single buffered']
    #allocation6 [shape = 's32[1]{0}', space=sflag, size = 0x4, scoped, tag = 'scoped memory for tpu_custom_call.1']
    #allocation7 [shape = 'u8[4096]{0}', space=vmem, size = 0x1000, scoped, tag = 'output window, operand 0, single buffered']
    %7 = vsyncpa [#allocation3], 0
    %8 = vsyncpa [#allocation6], 0
    %9 = vsyncpa [#allocation4], 0
    // Predicated region
    $region2: #{tpu_custom_call.1} parent=1 // pred_check
      _
    $region3: #{tpu_custom_call.1} parent=1 // pred_check_branch
      %11 = sbr.rel (0) target = $region5
    $region4: #{tpu_custom_call.1} parent=1 // pred_region
      %13 = vsyncadd [#allocation3], 0
      %s15 = sshll.u32 %s0, 4
      %s16 = int_to_ptr.hbm [resolvable:$true] %s15
      %s17 = sshll.u32 [#allocation2], 4
      %s18 = int_to_ptr.vmem [resolvable:$true] %s17
      %20 = dma.hbm_to_vmem [thread:$0]  %s16, 128, %s18, [#allocation3]
    $region5: #{tpu_custom_call.1} parent=1 // pred_fallthru
      _
    // Predicated region
    $region6: #{tpu_custom_call.1} parent=1 // pred_check
      _
    $region7: #{tpu_custom_call.1} parent=1 // pred_check_branch
      %22 = sbr.rel (0) target = $region9
    $region8: #{tpu_custom_call.1} parent=1 // pred_region
      %24 = vsyncadd [#allocation6], 0
      %s25 = sshll.u32 %s1, 4
      %s26 = int_to_ptr.hbm [resolvable:$true] %s25
      %s27 = sshll.u32 [#allocation5], 4
      %s28 = int_to_ptr.vmem [resolvable:$true] %s27
      %33 = dma.hbm_to_vmem [thread:$0]  %s26, 2048, %s28, [#allocation6], 128, 128, 8
    $region9: #{tpu_custom_call.1} parent=1 // pred_fallthru
      _
    // Predicated region
    $region10: #{tpu_custom_call.1} parent=1 // pred_check
      _
    $region11: #{tpu_custom_call.1} parent=1 // pred_check_branch
      %35 = sbr.rel (0) target = $region13
    $region12: #{tpu_custom_call.1} parent=1 // pred_region
      %37 = dma.done [#allocation3], 128
    $region13: #{tpu_custom_call.1} parent=1 // pred_fallthru
      _
    // Predicated region
    $region14: #{tpu_custom_call.1} parent=1 // pred_check
      _
    $region15: #{tpu_custom_call.1} parent=1 // pred_check_branch
      %39 = sbr.rel (0) target = $region17
    $region16: #{tpu_custom_call.1} parent=1 // pred_region
      %41 = dma.done [#allocation6], 2048
    $region17: #{tpu_custom_call.1} parent=1 // pred_fallthru
      _
    %v42 = vld [vmem:[#allocation2] sm:$0xff]
    %v43 = vld [vmem:[#allocation5] sm:$0xff]
    %v44 = vld [vmem:[#allocation5 + $0x8] sm:$0xff]
    %v45 = vld [vmem:[#allocation5 + $0x10] sm:$0xff]
    %v46 = vld [vmem:[#allocation5 + $0x18] sm:$0xff]
    %v47 = vld [vmem:[#allocation5 + $0x20] sm:$0xff]
    %v48 = vld [vmem:[#allocation5 + $0x28] sm:$0xff]
    %v49 = vld [vmem:[#allocation5 + $0x30] sm:$0xff]
    %v50 = vld [vmem:[#allocation5 + $0x38] sm:$0xff]
    %v51 = vld [vmem:[#allocation5 + $0x40] sm:$0xff]
    %v52 = vld [vmem:[#allocation5 + $0x48] sm:$0xff]
    %v53 = vld [vmem:[#allocation5 + $0x50] sm:$0xff]
    %v54 = vld [vmem:[#allocation5 + $0x58] sm:$0xff]
    %v55 = vld [vmem:[#allocation5 + $0x60] sm:$0xff]
    %v56 = vld [vmem:[#allocation5 + $0x68] sm:$0xff]
    %v57 = vld [vmem:[#allocation5 + $0x70] sm:$0xff]
    %v58 = vld [vmem:[#allocation5 + $0x78] sm:$0x1]
    %vm59 = vcmask 990208
    %v61 = vsel %vm59, %v42, 0
    %vm63 = vcmask 1040384
    %v65 = vsel %vm63, %v58, 0
    %67 = vmatpush.msra.mxu0 %v65
    %68 = vmatpush.msra.mxu0 %v57
    %69 = vmatpush.msra.mxu0 %v56
    %70 = vmatpush.msra.mxu0 %v55
    %71 = vmatpush.msra.mxu0 %v54
    %72 = vmatpush.msra.mxu0 %v53
    %73 = vmatpush.msra.mxu0 %v52
    %74 = vmatpush.msra.mxu0 %v51
    %75 = vmatpush.msra.mxu0 %v50
    %76 = vmatpush.msra.mxu0 %v49
    %77 = vmatpush.msra.mxu0 %v48
    %78 = vmatpush.msra.mxu0 %v47
    %79 = vmatpush.msra.mxu0 %v46
    %80 = vmatpush.msra.mxu0 %v45
    %81 = vmatpush.msra.mxu0 %v44
    %82 = vmatpush.msra.mxu0 %v43
    %83 = vmatmul.f32.gmra.mxu0 %v61
    %v84 = vpop.f32.mrf.mxu0
    %v85 = vadd.f32 0.0, %v84
    %86 = vdwg.mxu0
    %87 = vst.msk [vmem:[#allocation7] sm:$0xff] %vm59, %v85
    // Predicated region
    $region18: #{tpu_custom_call.1} parent=1 // pred_check
      _
    $region19: #{tpu_custom_call.1} parent=1 // pred_check_branch
      %89 = sbr.rel (0) target = $region21
    $region20: #{tpu_custom_call.1} parent=1 // pred_region
      %91 = vsyncadd [#allocation4], 0
      %s93 = sshll.u32 [#allocation7], 4
      %s94 = int_to_ptr.vmem [resolvable:$true] %s93
      %s95 = sshll.u32 %s2, 4
      %s96 = int_to_ptr.hbm [resolvable:$true] %s95
      %98 = dma.vmem_to_hbm [thread:$0]  %s94, 128, %s96, [#allocation4]
    $region21: #{tpu_custom_call.1} parent=1 // pred_fallthru
      _
    // Predicated region
    $region22: #{tpu_custom_call.1} parent=1 // pred_check
      _
    $region23: #{tpu_custom_call.1} parent=1 // pred_check_branch
      %100 = sbr.rel (0) target = $region25
    $region24: #{tpu_custom_call.1} parent=1 // pred_region
      %102 = dma.done [#allocation4], 128
    $region25: #{tpu_custom_call.1} parent=1 // pred_fallthru
      _
    %103 = vsyncpa [#allocation3], 1
    %104 = vsyncpa [#allocation6], 1
    %105 = vsyncpa [#allocation4], 1

</llo_original>
